<compile_context>
chip_gen: v7x
topology: tpu7x:2x2x1
jax: 0.10.0
libtpu: 0.0.40
codegen_flags: <defaults>
</compile_context>

<pallas_src>
import jax
import jax.numpy as jnp
from jax.experimental import pallas as pl
from jax.experimental.pallas import tpu as pltpu

_LANE = 128
_SUBLANE = 8


def _round_up(n, m):
    return ((n + m - 1) // m) * m


# -----------------------------------------------------------------------------
# One-time parameter preparation (call at model-load time, NOT per forward call).
# -----------------------------------------------------------------------------
def prepare_params(params, compute_dtype=jnp.bfloat16):
    w1 = jnp.asarray(params["w1"], jnp.float32)   # [Dout, Din]  (PyTorch layout)
    b1 = jnp.asarray(params["b1"], jnp.float32)   # [Dout]
    w2 = jnp.asarray(params["w2"], jnp.float32)   # [Dout, Dout]
    b2 = jnp.asarray(params["b2"], jnp.float32)   # [Dout]
    ws = params.get("ws")                         # [Dout, Din] or None

    Dout, Din = w1.shape
    Din_p = _round_up(Din, _LANE)
    Dout_p = _round_up(Dout, _LANE)

    def pad2(a, rows, cols):
        return jnp.pad(a, ((0, rows - a.shape[0]), (0, cols - a.shape[1])))

    w1_p = pad2(w1.T, Din_p, Dout_p).astype(compute_dtype)          # [Din_p, Dout_p]
    b1_p = jnp.pad(b1, (0, Dout_p - Dout))[None, :]                 # [1, Dout_p] f32
    w2s_p = pad2((0.1 * w2).T, Dout_p, Dout_p)                      # 0.1 folded in
    b2s_p = jnp.pad(0.1 * b2, (0, Dout_p - Dout))[None, :]          # [1, Dout_p] f32

    if ws is not None:
        ws_p = pad2(jnp.asarray(ws, jnp.float32).T, Din_p, Dout_p)
        # Fused second-stage weight: [relu(h) | x] @ [[0.1*w2^T]; [ws^T]]
        wcat = jnp.concatenate([w2s_p, ws_p], axis=0).astype(compute_dtype)
    else:
        wcat = w2s_p.astype(compute_dtype)

    return {
        "w1": w1_p, "b1": b1_p, "wcat": wcat, "b2": b2s_p,
        "din": Din, "dout": Dout, "din_p": Din_p, "dout_p": Dout_p,
        "has_skip": ws is not None,
    }


# -----------------------------------------------------------------------------
# Kernels
# -----------------------------------------------------------------------------
def _resblock_fused_skip_kernel(x_ref, w1_ref, b1_ref, wcat_ref, b2_ref, o_ref):
    # x: [TB, Din_p] f32; w1: [Din_p, Dout_p] bf16; wcat: [Dout_p+Din_p, Dout_p] bf16
    x = x_ref[...]
    h = jnp.dot(jnp.maximum(x, 0.0).astype(w1_ref.dtype), w1_ref[...],
                preferred_element_type=jnp.float32) + b1_ref[...]
    # Fuse (0.1 * layer2) and skip into one larger-K matmul.
    cat = jnp.concatenate([jnp.maximum(h, 0.0), x], axis=-1).astype(wcat_ref.dtype)
    y = jnp.dot(cat, wcat_ref[...],
                preferred_element_type=jnp.float32) + b2_ref[...]
    o_ref[...] = y.astype(o_ref.dtype)


def _resblock_identity_kernel(x_ref, w1_ref, b1_ref, w2_ref, b2_ref, o_ref):
    # in_size == out_size: skip is the (exact, f32) identity.
    x = x_ref[...]
    h = jnp.dot(jnp.maximum(x, 0.0).astype(w1_ref.dtype), w1_ref[...],
                preferred_element_type=jnp.float32) + b1_ref[...]
    y = jnp.dot(jnp.maximum(h, 0.0).astype(w2_ref.dtype), w2_ref[...],
                preferred_element_type=jnp.float32) + b2_ref[...]
    o_ref[...] = (y + x).astype(o_ref.dtype)


# -----------------------------------------------------------------------------
# Forward wrapper
# -----------------------------------------------------------------------------
def resblock_forward(x, prepped, *, max_batch_tile=512):
    """x: [B, in_size] float array. prepped: output of prepare_params()."""
    B, Din = x.shape
    assert Din == prepped["din"], "input feature size mismatch"
    Din_p, Dout_p, Dout = prepped["din_p"], prepped["dout_p"], prepped["dout"]

    # Batch tiling: pad rows to a sublane multiple, tile up to `max_batch_tile` rows.
    B_p = _round_up(B, _SUBLANE)
    TB = min(max_batch_tile, B_p)
    B_p = _round_up(B_p, TB)
    x_p = jnp.pad(x.astype(jnp.float32), ((0, B_p - B), (0, Din_p - Din)))

    w1, b1, wcat, b2 = prepped["w1"], prepped["b1"], prepped["wcat"], prepped["b2"]
    kernel = (_resblock_fused_skip_kernel if prepped["has_skip"]
              else _resblock_identity_kernel)

    x_spec = pl.BlockSpec((TB, Din_p), lambda i: (i, 0))
    out_spec = pl.BlockSpec((TB, Dout_p), lambda i: (i, 0))
    full = lambda shape: pl.BlockSpec(shape, lambda i: (0,) * len(shape))

    out = pl.pallas_call(
        kernel,
        out_shape=jax.ShapeDtypeStruct((B_p, Dout_p), jnp.float32),
        grid=(B_p // TB,),
        in_specs=[x_spec, full(w1.shape), full(b1.shape),
                  full(wcat.shape), full(b2.shape)],
        out_specs=out_spec,
        compiler_params=pltpu.CompilerParams(
            dimension_semantics=("parallel",)),
    )(x_p, w1, b1, wcat, b2)

    return out[:B, :Dout]


# -----------------------------------------------------------------------------
# Pure-JAX f32 reference mirroring the PyTorch forward exactly.
# -----------------------------------------------------------------------------
def _reference(x, params):
    relu = lambda v: jnp.maximum(v, 0.0)
    h = relu(x) @ params["w1"].T + params["b1"]
    y = relu(h) @ params["w2"].T + params["b2"]
    skip = x @ params["ws"].T if params.get("ws") is not None else x
    return y * 0.1 + skip


if __name__ == "__main__":
    key = jax.random.PRNGKey(0)
    B, in_size, out_size = 8, 32, 64   # in != out -> skip is Linear(bias=False)

    k = jax.random.split(key, 6)
    x = jax.random.normal(k[0], (B, in_size), dtype=jnp.float32)
    params = {
        "w1": jax.random.normal(k[1], (out_size, in_size), jnp.float32) * 0.1,
        "b1": jax.random.normal(k[2], (out_size,), jnp.float32) * 0.1,
        "w2": jax.random.normal(k[3], (out_size, out_size), jnp.float32) * 0.1,
        "b2": jax.random.normal(k[4], (out_size,), jnp.float32) * 0.1,
        "ws": jax.random.normal(k[5], (out_size, in_size), jnp.float32) * 0.1,
    }

    # bf16 matmuls -> loosened tolerance vs the f32 reference.
    TOL = dict(atol=5e-2, rtol=5e-2)

    # 1) Linear-skip path.
    prepped = prepare_params(params)
    out = jax.block_until_ready(resblock_forward(x, prepped))
    ref = _reference(x, params)
    assert out.shape == (B, out_size)
    assert jnp.allclose(out, ref, **TOL), "skip-matmul path mismatch"

    # 2) Identity-skip path (in_size == out_size).
    x2 = jax.random.normal(k[0], (B, out_size), jnp.float32)
    params_id = dict(params)
    params_id["w1"] = jax.random.normal(k[1], (out_size, out_size), jnp.float32) * 0.1
    params_id["ws"] = None
    prepped_id = prepare_params(params_id)
    out2 = jax.block_until_ready(resblock_forward(x2, prepped_id))
    ref2 = _reference(x2, params_id)
    assert out2.shape == (B, out_size)
    assert jnp.allclose(out2, ref2, **TOL), "identity-skip path mismatch"

    # 3) Multi-tile batch grid (exercises row padding + parallel grid axis).
    B3 = 300
    x3 = jax.random.normal(k[0], (B3, in_size), jnp.float32)
    out3 = jax.block_until_ready(resblock_forward(x3, prepped, max_batch_tile=128))
    ref3 = _reference(x3, params)
    assert out3.shape == (B3, out_size)
    assert jnp.allclose(out3, ref3, **TOL), "batch-tiled path mismatch"

    print("KERNEL_OK")
</pallas_src>

<mosaic_0001>
module attributes {stable_mosaic.version = 11 : i64} {
  func.func @_resblock_fused_skip_kernel(%arg0: i32, %arg1: memref<8x128xf32, #tpu.memory_space<vmem>>, %arg2: memref<128x128xbf16, #tpu.memory_space<vmem>>, %arg3: memref<1x128xf32, #tpu.memory_space<vmem>>, %arg4: memref<256x128xbf16, #tpu.memory_space<vmem>>, %arg5: memref<1x128xf32, #tpu.memory_space<vmem>>, %arg6: memref<8x128xf32, #tpu.memory_space<vmem>>) attributes {dimension_semantics = [#tpu.dimension_semantics<parallel>], iteration_bounds = array<i64: 1>, scalar_prefetch = 0 : i64, scratch_operands = 0 : i64, tpu.core_type = #tpu.core_type<tc>, window_params = [{transform_indices = @transform_0, window_bounds = array<i64: 8, 128>}, {pipeline_mode = #tpu.pipeline_mode<synchronous>, transform_indices = @transform_1, window_bounds = array<i64: 128, 128>}, {pipeline_mode = #tpu.pipeline_mode<synchronous>, transform_indices = @transform_2, window_bounds = array<i64: 1, 128>}, {pipeline_mode = #tpu.pipeline_mode<synchronous>, transform_indices = @transform_3, window_bounds = array<i64: 256, 128>}, {pipeline_mode = #tpu.pipeline_mode<synchronous>, transform_indices = @transform_4, window_bounds = array<i64: 1, 128>}, {transform_indices = @transform_5, window_bounds = array<i64: 8, 128>}]} {
    %c0 = arith.constant 0 : index
    %c0_0 = arith.constant 0 : index
    %0 = vector.load %arg1[%c0, %c0_0] : memref<8x128xf32, #tpu.memory_space<vmem>>, vector<8x128xf32>
    %cst = arith.constant 0.000000e+00 : f32
    %1 = vector.broadcast %cst : f32 to vector<8x128xf32>
    %2 = arith.maximumf %0, %1 : vector<8x128xf32>
    %3 = arith.truncf %2 : vector<8x128xf32> to vector<8x128xbf16>
    %c0_1 = arith.constant 0 : index
    %c0_2 = arith.constant 0 : index
    %4 = vector.load %arg2[%c0_1, %c0_2] : memref<128x128xbf16, #tpu.memory_space<vmem>>, vector<128x128xbf16>
    %cst_3 = arith.constant dense<0.000000e+00> : vector<8x128xf32>
    %5 = tpu.matmul %3, %4, %cst_3 {dimension_numbers = #tpu.dot_dimension_numbers<[1], [0], [0], [1], [0, 0, 1, 1], [], []>} : vector<8x128xbf16>, vector<128x128xbf16>, vector<8x128xf32> -> vector<8x128xf32>
    %c0_4 = arith.constant 0 : index
    %c0_5 = arith.constant 0 : index
    %6 = vector.load %arg3[%c0_4, %c0_5] : memref<1x128xf32, #tpu.memory_space<vmem>>, vector<1x128xf32>
    %7 = vector.broadcast %6 : vector<1x128xf32> to vector<8x128xf32>
    %8 = arith.addf %5, %7 : vector<8x128xf32>
    %cst_6 = arith.constant 0.000000e+00 : f32
    %9 = vector.broadcast %cst_6 : f32 to vector<8x128xf32>
    %10 = arith.maximumf %8, %9 : vector<8x128xf32>
    %11 = tpu.concatenate %10, %0 in 1 : vector<8x128xf32>, vector<8x128xf32> -> vector<8x256xf32>
    %12 = arith.truncf %11 : vector<8x256xf32> to vector<8x256xbf16>
    %c0_7 = arith.constant 0 : index
    %c0_8 = arith.constant 0 : index
    %13 = vector.load %arg4[%c0_7, %c0_8] : memref<256x128xbf16, #tpu.memory_space<vmem>>, vector<256x128xbf16>
    %cst_9 = arith.constant dense<0.000000e+00> : vector<8x128xf32>
    %14 = tpu.matmul %12, %13, %cst_9 {dimension_numbers = #tpu.dot_dimension_numbers<[1], [0], [0], [1], [0, 0, 1, 1], [], []>} : vector<8x256xbf16>, vector<256x128xbf16>, vector<8x128xf32> -> vector<8x128xf32>
    %c0_10 = arith.constant 0 : index
    %c0_11 = arith.constant 0 : index
    %15 = vector.load %arg5[%c0_10, %c0_11] : memref<1x128xf32, #tpu.memory_space<vmem>>, vector<1x128xf32>
    %16 = vector.broadcast %15 : vector<1x128xf32> to vector<8x128xf32>
    %17 = arith.addf %14, %16 : vector<8x128xf32>
    %c0_12 = arith.constant 0 : index
    %c0_13 = arith.constant 0 : index
    %18 = vector.load %arg6[%c0_12, %c0_13] : memref<8x128xf32, #tpu.memory_space<vmem>>, vector<8x128xf32>
    tpu.vector_store %arg6[%c0_12, %c0_13], %17 {strides = array<i32>} : memref<8x128xf32, #tpu.memory_space<vmem>>, vector<8x128xf32>,
    return
  }
  func.func @transform_0(%arg0: i32) -> (i32, i32) {
    %c0_i32 = arith.constant 0 : i32
    %c0_i32_0 = arith.constant 0 : i32
    return %arg0, %c0_i32 : i32, i32
  }
  func.func @transform_1(%arg0: i32) -> (i32, i32) {
    %c0_i32 = arith.constant 0 : i32
    %c0_i32_0 = arith.constant 0 : i32
    %c0_i32_1 = arith.constant 0 : i32
    return %c0_i32, %c0_i32_0 : i32, i32
  }
  func.func @transform_2(%arg0: i32) -> (i32, i32) {
    %c0_i32 = arith.constant 0 : i32
    %c0_i32_0 = arith.constant 0 : i32
    %c0_i32_1 = arith.constant 0 : i32
    return %c0_i32, %c0_i32_0 : i32, i32
  }
  func.func @transform_3(%arg0: i32) -> (i32, i32) {
    %c0_i32 = arith.constant 0 : i32
    %c0_i32_0 = arith.constant 0 : i32
    %c0_i32_1 = arith.constant 0 : i32
    return %c0_i32, %c0_i32_0 : i32, i32
  }
  func.func @transform_4(%arg0: i32) -> (i32, i32) {
    %c0_i32 = arith.constant 0 : i32
    %c0_i32_0 = arith.constant 0 : i32
    %c0_i32_1 = arith.constant 0 : i32
    return %c0_i32, %c0_i32_0 : i32, i32
  }
  func.func @transform_5(%arg0: i32) -> (i32, i32) {
    %c0_i32 = arith.constant 0 : i32
    %c0_i32_0 = arith.constant 0 : i32
    return %arg0, %c0_i32 : i32, i32
  }
}

</mosaic_0001>

<llo_original>
// kernel: tpu_custom_call.1
$region0: #{tpu_custom_call.1}
  #allocation0 [shape = 'u32[]', space=smem, size = 0x4, offset = 0x4, fixed_abs, tag = 'smem constant byte address 0x4 - core index']
  #allocation1 [shape = 'u32[144,128]{1,0:T(1,128)}', space=vmem, size = 0x12000, scoped, tag = 'internal scratch']
  %s0 = inlined_call_operand.hbm [shape: f32[8,128], index: 0, kind: input, shape index: {}]
  %s1 = inlined_call_operand.hbm [shape: bf16[128,128], index: 1, kind: input, shape index: {}]
  %s2 = inlined_call_operand.vmem [shape: f32[1,128], index: 2, kind: input, shape index: {}]
  %s3 = inlined_call_operand.hbm [shape: bf16[256,128], index: 3, kind: input, shape index: {}]
  %s4 = inlined_call_operand.vmem [shape: f32[1,128], index: 4, kind: input, shape index: {}]
  %s5 = inlined_call_operand.hbm [shape: f32[8,128], index: 5, kind: output, shape index: {}]
  %s6 = sld [smem:[#allocation0]]
  $region42: #{tpu_custom_call.1} parent=0
    _
  %s8 = ssub.s32 1, %s6
  %s9 = scalar_select 0, %s8, %s6
  $region1: #{tpu_custom_call.1} parent=0
    #allocation2 [shape = 'u8[4096]{0}', space=vmem, size = 0x1000, scoped, tag = 'input window, operand 0, single buffered']
    #allocation3 [shape = 's32[1]{0}', space=sflag, size = 0x4, scoped, tag = 'scoped memory for tpu_custom_call.1']
    #allocation4 [shape = 's32[1]{0}', space=sflag, size = 0x4, scoped, tag = 'scoped memory for tpu_custom_call.1']
    #allocation5 [shape = 'u8[32768]{0}', space=vmem, size = 0x8000, scoped, tag = 'input window, operand 1, single buffered']
    #allocation6 [shape = 's32[1]{0}', space=sflag, size = 0x4, scoped, tag = 'scoped memory for tpu_custom_call.1']
    #allocation7 [shape = 'u8[65536]{0}', space=vmem, size = 0x10000, scoped, tag = 'input window, operand 3, single buffered']
    #allocation8 [shape = 'u8[4096]{0}', space=vmem, size = 0x1000, scoped, tag = 'output window, operand 0, single buffered']
    %10 = vsyncpa [#allocation3], 0
    %11 = vsyncpa [#allocation6], 0
    %12 = vsyncpa [#allocation4], 0
    // Predicated region
    $region2: #{tpu_custom_call.1} parent=1 // pred_check
      _
    $region3: #{tpu_custom_call.1} parent=1 // pred_check_branch
      %14 = sbr.rel (0) target = $region5
    $region4: #{tpu_custom_call.1} parent=1 // pred_region
      %s16 = ssub.s32 128, 128
      %17 = vsyncadd [#allocation3], %s16
      %s19 = sshll.u32 [#allocation2], 4
      %s20 = int_to_ptr.vmem [resolvable:$true] %s19
      %22 = dma.hbm_to_vmem [thread:$0]  %s0, 128, %s20, [#allocation3]
    $region5: #{tpu_custom_call.1} parent=1 // pred_fallthru
      _
    // Predicated region
    $region6: #{tpu_custom_call.1} parent=1 // pred_check
      _
    $region7: #{tpu_custom_call.1} parent=1 // pred_check_branch
      %24 = sbr.rel (0) target = $region9
    $region8: #{tpu_custom_call.1} parent=1 // pred_region
      %s26 = ssub.s32 1024, 1024
      %27 = vsyncadd [#allocation6], %s26
      %s28 = sshll.u32 [#allocation5], 4
      %s29 = int_to_ptr.vmem [resolvable:$true] %s28
      %34 = dma.hbm_to_vmem [thread:$0]  %s1, 1024, %s29, [#allocation6], 64, 64, 4
    $region9: #{tpu_custom_call.1} parent=1 // pred_fallthru
      _
    // Predicated region
    $region10: #{tpu_custom_call.1} parent=1 // pred_check
      _
    $region11: #{tpu_custom_call.1} parent=1 // pred_check_branch
      %36 = sbr.rel (0) target = $region13
    $region12: #{tpu_custom_call.1} parent=1 // pred_region
      _
    $region13: #{tpu_custom_call.1} parent=1 // pred_fallthru
      _
    // Predicated region
    $region14: #{tpu_custom_call.1} parent=1 // pred_check
      _
    $region15: #{tpu_custom_call.1} parent=1 // pred_check_branch
      %38 = sbr.rel (0) target = $region17
    $region16: #{tpu_custom_call.1} parent=1 // pred_region
      %s40 = ssub.s32 2048, 2048
      %41 = vsyncadd [#allocation6], %s40
      %s42 = sshll.u32 [#allocation7], 4
      %s43 = int_to_ptr.vmem [resolvable:$true] %s42
      %48 = dma.hbm_to_vmem [thread:$0]  %s3, 2048, %s43, [#allocation6], 64, 64, 4
    $region17: #{tpu_custom_call.1} parent=1 // pred_fallthru
      _
    // Predicated region
    $region18: #{tpu_custom_call.1} parent=1 // pred_check
      _
    $region19: #{tpu_custom_call.1} parent=1 // pred_check_branch
      %50 = sbr.rel (0) target = $region21
    $region20: #{tpu_custom_call.1} parent=1 // pred_region
      _
    $region21: #{tpu_custom_call.1} parent=1 // pred_fallthru
      _
    // Predicated region
    $region22: #{tpu_custom_call.1} parent=1 // pred_check
      _
    $region23: #{tpu_custom_call.1} parent=1 // pred_check_branch
      %52 = sbr.rel (0) target = $region25
    $region24: #{tpu_custom_call.1} parent=1 // pred_region
      %53 = dma.done [#allocation3], 128
    $region25: #{tpu_custom_call.1} parent=1 // pred_fallthru
      _
    // Predicated region
    $region26: #{tpu_custom_call.1} parent=1 // pred_check
      _
    $region27: #{tpu_custom_call.1} parent=1 // pred_check_branch
      %55 = sbr.rel (0) target = $region29
    $region28: #{tpu_custom_call.1} parent=1 // pred_region
      %56 = dma.done [#allocation6], 1024
    $region29: #{tpu_custom_call.1} parent=1 // pred_fallthru
      _
    // Predicated region
    $region30: #{tpu_custom_call.1} parent=1 // pred_check
      _
    $region31: #{tpu_custom_call.1} parent=1 // pred_check_branch
      %58 = sbr.rel (0) target = $region33
    $region32: #{tpu_custom_call.1} parent=1 // pred_region
      %59 = dma.done [#allocation6], 2048
    $region33: #{tpu_custom_call.1} parent=1 // pred_fallthru
      _
    %v61 = vld [vmem:[#allocation2] sm:$0xff]
    %v62 = vmax.f32 %v61, 0.0
    %v63 = vpack.c.bf16 %v62, %v62
    %v64 = vld [vmem:[#allocation5] sm:$0xf]
    %v65 = vld [vmem:[#allocation5 + $0x4] sm:$0xf]
    %v66 = vld [vmem:[#allocation5 + $0x8] sm:$0xf]
    %v67 = vld [vmem:[#allocation5 + $0xc] sm:$0xf]
    %v68 = vld [vmem:[#allocation5 + $0x10] sm:$0xf]
    %v69 = vld [vmem:[#allocation5 + $0x14] sm:$0xf]
    %v70 = vld [vmem:[#allocation5 + $0x18] sm:$0xf]
    %v71 = vld [vmem:[#allocation5 + $0x1c] sm:$0xf]
    %v72 = vld [vmem:[#allocation5 + $0x20] sm:$0xf]
    %v73 = vld [vmem:[#allocation5 + $0x24] sm:$0xf]
    %v74 = vld [vmem:[#allocation5 + $0x28] sm:$0xf]
    %v75 = vld [vmem:[#allocation5 + $0x2c] sm:$0xf]
    %v76 = vld [vmem:[#allocation5 + $0x30] sm:$0xf]
    %v77 = vld [vmem:[#allocation5 + $0x34] sm:$0xf]
    %v78 = vld [vmem:[#allocation5 + $0x38] sm:$0xf]
    %v79 = vld [vmem:[#allocation5 + $0x3c] sm:$0xf]
    %v80 = vld [vmem:[%s2] sm:$0x1]
    %v82 = vlaneseq
    %v83 = vshrl.u32 %v82, 7
    %v84 = vsub.s32 0, %v83
    %v85 = vrot.slane %v80, %v84
    %v103 = vunpack.c.l.b16 %v64
    %v104 = vunpack.c.l.b16 %v65
    %v105 = vunpack.c.l.b16 %v66
    %v106 = vunpack.c.l.b16 %v67
    %v107 = vunpack.c.l.b16 %v68
    %v108 = vunpack.c.l.b16 %v69
    %v109 = vunpack.c.l.b16 %v70
    %v110 = vunpack.c.l.b16 %v71
    %v111 = vunpack.c.l.b16 %v72
    %v112 = vunpack.c.l.b16 %v73
    %v113 = vunpack.c.l.b16 %v74
    %v114 = vunpack.c.l.b16 %v75
    %v115 = vunpack.c.l.b16 %v76
    %v116 = vunpack.c.l.b16 %v77
    %v117 = vunpack.c.l.b16 %v78
    %v118 = vunpack.c.l.b16 %v79
    %v119 = vpack.c.b16 %v104, %v103
    %v120 = vpack.c.b16 %v106, %v105
    %v121 = vpack.c.b16 %v108, %v107
    %v122 = vpack.c.b16 %v110, %v109
    %v123 = vpack.c.b16 %v112, %v111
    %v124 = vpack.c.b16 %v114, %v113
    %v125 = vpack.c.b16 %v116, %v115
    %v126 = vpack.c.b16 %v118, %v117
    %135 = vmatprep.subr.bf16.mxu0 0
    %136 = vmatpush1.bf16.msra.mxu0 %v119
    %137 = vmatprep.subr.bf16.mxu0 0
    %138 = vmatpush1.bf16.msra.mxu0 %v120
    %139 = vmatprep.subr.bf16.mxu0 0
    %140 = vmatpush1.bf16.msra.mxu0 %v121
    %141 = vmatprep.subr.bf16.mxu0 0
    %142 = vmatpush1.bf16.msra.mxu0 %v122
    %143 = vmatprep.subr.bf16.mxu0 0
    %144 = vmatpush1.bf16.msra.mxu0 %v123
    %145 = vmatprep.subr.bf16.mxu0 0
    %146 = vmatpush1.bf16.msra.mxu0 %v124
    %147 = vmatprep.subr.bf16.mxu0 0
    %148 = vmatpush1.bf16.msra.mxu0 %v125
    %149 = vmatprep.subr.bf16.mxu0 0
    %150 = vmatpush1.bf16.msra.mxu0 %v126
    %151 = vmatprep.subr.bf16.mxu0 0
    %152 = vmatpush1.bf16.msra.mxu0 0
    %153 = vmatprep.subr.bf16.mxu0 0
    %154 = vmatpush1.bf16.msra.mxu0 0
    %155 = vmatprep.subr.bf16.mxu0 0
    %156 = vmatpush1.bf16.msra.mxu0 0
    %157 = vmatprep.subr.bf16.mxu0 0
    %158 = vmatpush1.bf16.msra.mxu0 0
    %159 = vmatprep.subr.bf16.mxu0 0
    %160 = vmatpush1.bf16.msra.mxu0 0
    %161 = vmatprep.subr.bf16.mxu0 0
    %162 = vmatpush1.bf16.msra.mxu0 0
    %163 = vmatprep.subr.bf16.mxu0 0
    %164 = vmatpush1.bf16.msra.mxu0 0
    %165 = vmatprep.subr.bf16.mxu0 0
    %166 = vmatpush1.bf16.msra.mxu0 0
    %167 = vmatprep.mubr.bf16.mxu0 0
    %168 = vmatmul.mubr.bf16.gmra.mrb[0].mxu0 %v63
    %v169 = vpop.f32.mrb[0].mxu0
    %v170 = vadd.f32 %v85, %v169
    %v171 = vpop.f32.mrb[0].mxu0
    %v172 = vpop.f32.mrb[0].mxu0
    %v173 = vpop.f32.mrb[0].mxu0
    %174 = vdwg.mxu0
    %v175 = vmax.f32 %v170, 0.0
    %v176 = vpack.c.bf16 %v175, %v175
    %v177 = vpack.c.bf16 %v61, %v61
    %v178 = vld [vmem:[#allocation7] sm:$0xf]
    %v179 = vld [vmem:[#allocation7 + $0x4] sm:$0xf]
    %v180 = vld [vmem:[#allocation7 + $0x8] sm:$0xf]
    %v181 = vld [vmem:[#allocation7 + $0xc] sm:$0xf]
    %v182 = vld [vmem:[#allocation7 + $0x10] sm:$0xf]
    %v183 = vld [vmem:[#allocation7 + $0x14] sm:$0xf]
    %v184 = vld [vmem:[#allocation7 + $0x18] sm:$0xf]
    %v185 = vld [vmem:[#allocation7 + $0x1c] sm:$0xf]
    %v186 = vld [vmem:[#allocation7 + $0x20] sm:$0xf]
    %v187 = vld [vmem:[#allocation7 + $0x24] sm:$0xf]
    %v188 = vld [vmem:[#allocation7 + $0x28] sm:$0xf]
    %v189 = vld [vmem:[#allocation7 + $0x2c] sm:$0xf]
    %v190 = vld [vmem:[#allocation7 + $0x30] sm:$0xf]
    %v191 = vld [vmem:[#allocation7 + $0x34] sm:$0xf]
    %v192 = vld [vmem:[#allocation7 + $0x38] sm:$0xf]
    %v193 = vld [vmem:[#allocation7 + $0x3c] sm:$0xf]
    %v194 = vld [vmem:[#allocation7 + $0x40] sm:$0xf]
    %v195 = vld [vmem:[#allocation7 + $0x44] sm:$0xf]
    %v196 = vld [vmem:[#allocation7 + $0x48] sm:$0xf]
    %v197 = vld [vmem:[#allocation7 + $0x4c] sm:$0xf]
    %v198 = vld [vmem:[#allocation7 + $0x50] sm:$0xf]
    %v199 = vld [vmem:[#allocation7 + $0x54] sm:$0xf]
    %v200 = vld [vmem:[#allocation7 + $0x58] sm:$0xf]
    %v201 = vld [vmem:[#allocation7 + $0x5c] sm:$0xf]
    %v202 = vld [vmem:[#allocation7 + $0x60] sm:$0xf]
    %v203 = vld [vmem:[#allocation7 + $0x64] sm:$0xf]
    %v204 = vld [vmem:[#allocation7 + $0x68] sm:$0xf]
    %v205 = vld [vmem:[#allocation7 + $0x6c] sm:$0xf]
    %v206 = vld [vmem:[#allocation7 + $0x70] sm:$0xf]
    %v207 = vld [vmem:[#allocation7 + $0x74] sm:$0xf]
    %v208 = vld [vmem:[#allocation7 + $0x78] sm:$0xf]
    %v209 = vld [vmem:[#allocation7 + $0x7c] sm:$0xf]
    %v210 = vld [vmem:[%s4] sm:$0x1]
    %v212 = vlaneseq
    %v213 = vshrl.u32 %v212, 7
    %v214 = vsub.s32 0, %v213
    %v215 = vrot.slane %v210, %v214
    %v249 = vunpack.c.l.b16 %v178
    %v250 = vunpack.c.l.b16 %v179
    %v251 = vunpack.c.l.b16 %v180
    %v252 = vunpack.c.l.b16 %v181
    %v253 = vunpack.c.l.b16 %v182
    %v254 = vunpack.c.l.b16 %v183
    %v255 = vunpack.c.l.b16 %v184
    %v256 = vunpack.c.l.b16 %v185
    %v257 = vunpack.c.l.b16 %v186
    %v258 = vunpack.c.l.b16 %v187
    %v259 = vunpack.c.l.b16 %v188
    %v260 = vunpack.c.l.b16 %v189
    %v261 = vunpack.c.l.b16 %v190
    %v262 = vunpack.c.l.b16 %v191
    %v263 = vunpack.c.l.b16 %v192
    %v264 = vunpack.c.l.b16 %v193
    %v265 = vunpack.c.l.b16 %v194
    %v266 = vunpack.c.l.b16 %v195
    %v267 = vunpack.c.l.b16 %v196
    %v268 = vunpack.c.l.b16 %v197
    %v269 = vunpack.c.l.b16 %v198
    %v270 = vunpack.c.l.b16 %v199
    %v271 = vunpack.c.l.b16 %v200
    %v272 = vunpack.c.l.b16 %v201
    %v273 = vunpack.c.l.b16 %v202
    %v274 = vunpack.c.l.b16 %v203
    %v275 = vunpack.c.l.b16 %v204
    %v276 = vunpack.c.l.b16 %v205
    %v277 = vunpack.c.l.b16 %v206
    %v278 = vunpack.c.l.b16 %v207
    %v279 = vunpack.c.l.b16 %v208
    %v280 = vunpack.c.l.b16 %v209
    %v281 = vpack.c.b16 %v250, %v249
    %v282 = vpack.c.b16 %v252, %v251
    %v283 = vpack.c.b16 %v254, %v253
    %v284 = vpack.c.b16 %v256, %v255
    %v285 = vpack.c.b16 %v258, %v257
    %v286 = vpack.c.b16 %v260, %v259
    %v287 = vpack.c.b16 %v262, %v261
    %v288 = vpack.c.b16 %v264, %v263
    %v289 = vpack.c.b16 %v266, %v265
    %v290 = vpack.c.b16 %v268, %v267
    %v291 = vpack.c.b16 %v270, %v269
    %v292 = vpack.c.b16 %v272, %v271
    %v293 = vpack.c.b16 %v274, %v273
    %v294 = vpack.c.b16 %v276, %v275
    %v295 = vpack.c.b16 %v278, %v277
    %v296 = vpack.c.b16 %v280, %v279
    %313 = vmatprep.subr.bf16.mxu0 0
    %314 = vmatpush1.bf16.msra.mxu0 %v281
    %315 = vmatprep.subr.bf16.mxu0 0
    %316 = vmatpush1.bf16.msra.mxu0 %v282
    %317 = vmatprep.subr.bf16.mxu0 0
    %318 = vmatpush1.bf16.msra.mxu0 %v283
    %319 = vmatprep.subr.bf16.mxu0 0
    %320 = vmatpush1.bf16.msra.mxu0 %v284
    %321 = vmatprep.subr.bf16.mxu0 0
    %322 = vmatpush1.bf16.msra.mxu0 %v285
    %323 = vmatprep.subr.bf16.mxu0 0
    %324 = vmatpush1.bf16.msra.mxu0 %v286
    %325 = vmatprep.subr.bf16.mxu0 0
    %326 = vmatpush1.bf16.msra.mxu0 %v287
    %327 = vmatprep.subr.bf16.mxu0 0
    %328 = vmatpush1.bf16.msra.mxu0 %v288
    %329 = vmatprep.subr.bf16.mxu0 0
    %330 = vmatpush1.bf16.msra.mxu0 %v289
    %331 = vmatprep.subr.bf16.mxu0 0
    %332 = vmatpush1.bf16.msra.mxu0 %v290
    %333 = vmatprep.subr.bf16.mxu0 0
    %334 = vmatpush1.bf16.msra.mxu0 %v291
    %335 = vmatprep.subr.bf16.mxu0 0
    %336 = vmatpush1.bf16.msra.mxu0 %v292
    %337 = vmatprep.subr.bf16.mxu0 0
    %338 = vmatpush1.bf16.msra.mxu0 %v293
    %339 = vmatprep.subr.bf16.mxu0 0
    %340 = vmatpush1.bf16.msra.mxu0 %v294
    %341 = vmatprep.subr.bf16.mxu0 0
    %342 = vmatpush1.bf16.msra.mxu0 %v295
    %343 = vmatprep.subr.bf16.mxu0 0
    %344 = vmatpush1.bf16.msra.mxu0 %v296
    %345 = vmatprep.mubr.bf16.mxu0 %v177
    %346 = vmatmul.mubr.bf16.gmra.mrb[0].mxu0 %v176
    %v347 = vpop.f32.mrb[0].mxu0
    %v348 = vadd.f32 %v215, %v347
    %v349 = vpop.f32.mrb[0].mxu0
    %v350 = vpop.f32.mrb[0].mxu0
    %v351 = vpop.f32.mrb[0].mxu0
    %352 = vdwg.mxu0
    %353 = vst [vmem:[#allocation8] sm:$0xff] %v348
    // Predicated region
    $region34: #{tpu_custom_call.1} parent=1 // pred_check
      _
    $region35: #{tpu_custom_call.1} parent=1 // pred_check_branch
      %355 = sbr.rel (0) target = $region37
    $region36: #{tpu_custom_call.1} parent=1 // pred_region
      %s357 = ssub.s32 128, 128
      %358 = vsyncadd [#allocation4], %s357
      %s360 = sshll.u32 [#allocation8], 4
      %s361 = int_to_ptr.vmem [resolvable:$true] %s360
      %363 = dma.vmem_to_hbm [thread:$0]  %s361, 128, %s5, [#allocation4]
    $region37: #{tpu_custom_call.1} parent=1 // pred_fallthru
      _
    // Predicated region
    $region38: #{tpu_custom_call.1} parent=1 // pred_check
      _
    $region39: #{tpu_custom_call.1} parent=1 // pred_check_branch
      %365 = sbr.rel (0) target = $region41
    $region40: #{tpu_custom_call.1} parent=1 // pred_region
      %366 = dma.done [#allocation4], 128
    $region41: #{tpu_custom_call.1} parent=1 // pred_fallthru
      _
    %367 = vsyncpa [#allocation3], 1
    %368 = vsyncpa [#allocation6], 1
    %369 = vsyncpa [#allocation4], 1

</llo_original>
